<compile_context>
chip_gen: v6e
topology: v6e:2x2x1
jax: 0.10.0
libtpu: 0.0.40
codegen_flags: <defaults>
</compile_context>

<pallas_src>
import functools

import jax
import jax.numpy as jnp
from jax.experimental import pallas as pl
from jax.experimental.pallas import tpu as pltpu


def _round_up(n, m):
    return ((n + m - 1) // m) * m


def _vib_train_kernel(x_ref, w_ref, b_ref, eps_ref, z_ref, klp_ref, *,
                      out_pad, batch, block_b, negative_slope):
    x = x_ref[...]
    if negative_slope is not None:                    # optional pre_activation (LeakyReLU)
        x = jnp.where(x > 0, x, x * negative_slope)

    # Fused matmul: [TB, in_dim] @ [in_dim, 2*out_pad] -> f32 accum (MXU).
    y = jnp.dot(x, w_ref[...], preferred_element_type=jnp.float32) + b_ref[...]
    mu = y[:, :out_pad]
    log_var = y[:, out_pad:]

    # One EUP pass; exp(log_var) == std * std.
    std = jnp.exp(0.5 * log_var)

    # KL partial: sum_d(1 + log_var - mu^2 - exp(log_var)) over valid rows of
    # this batch tile.  Zero-padded feature columns contribute exactly 0.
    per_sample = jnp.sum(1.0 + log_var - mu * mu - std * std,
                         axis=1, keepdims=True)                       # [TB, 1]
    row0 = pl.program_id(0) * block_b
    rows = row0 + jax.lax.broadcasted_iota(jnp.int32, per_sample.shape, 0)
    klp = jnp.sum(jnp.where(rows < batch, per_sample, 0.0))
    klp_ref[...] = jnp.full(klp_ref.shape, klp, dtype=klp_ref.dtype)  # lane-padded row

    # Reparameterize: z = eps * std + mu   (lane-dense store, out_pad % 128 == 0)
    z_ref[...] = (eps_ref[...].astype(jnp.float32) * std + mu).astype(z_ref.dtype)


def _vib_eval_kernel(x_ref, w_ref, b_ref, mu_ref, *, negative_slope):
    x = x_ref[...]
    if negative_slope is not None:
        x = jnp.where(x > 0, x, x * negative_slope)
    mu = jnp.dot(x, w_ref[...], preferred_element_type=jnp.float32) + b_ref[...]
    mu_ref[...] = mu.astype(mu_ref.dtype)


def vib_forward(x, w_mu, b_mu, w_lv, b_lv, *, lambda_=0.05, key=None,
                training=True, negative_slope=None, block_b=256):
    """Pallas VIB forward.

    x: [B, in_dim]; w_*: [in_dim, out_dim]; b_*: [out_dim].
    Returns (z, kl_loss) if training else mu.
    """
    B, in_dim = x.shape
    out_dim = w_mu.shape[1]
    out_pad = _round_up(out_dim, 128)           # lane-dense feature axis

    tb = min(block_b, _round_up(B, 8))          # batch tile (sublane-aligned)
    b_pad = _round_up(B, tb)
    n_tiles = b_pad // tb

    x_p = x if b_pad == B else jnp.pad(x, ((0, b_pad - B), (0, 0)))

    def pad_feat(w, b):
        w_p = jnp.pad(w, ((0, 0), (0, out_pad - out_dim)))
        b_p = jnp.pad(b, (0, out_pad - out_dim)).reshape(1, out_pad).astype(jnp.float32)
        return w_p, b_p

    wmu_p, bmu_p = pad_feat(w_mu, b_mu)

    cparams = pltpu.CompilerParams(
        dimension_semantics=("parallel",),
        vmem_limit_bytes=48 * 1024 * 1024)

    if not training:
        kern = functools.partial(_vib_eval_kernel, negative_slope=negative_slope)
        mu = pl.pallas_call(
            kern,
            out_shape=jax.ShapeDtypeStruct((b_pad, out_pad), x.dtype),
            grid=(n_tiles,),
            in_specs=[pl.BlockSpec((tb, in_dim), lambda i: (i, 0)),
                      pl.BlockSpec((in_dim, out_pad), lambda i: (0, 0)),   # resident
                      pl.BlockSpec((1, out_pad), lambda i: (0, 0))],       # resident
            out_specs=pl.BlockSpec((tb, out_pad), lambda i: (i, 0)),
            compiler_params=cparams,
        )(x_p, wmu_p, bmu_p)
        return mu[:B, :out_dim]

    assert key is not None, "training=True requires a PRNG key for epsilon"
    wlv_p, blv_p = pad_feat(w_lv, b_lv)
    # Fused weights: columns [0:out_pad] -> mu, [out_pad:2*out_pad] -> log_var.
    w_cat = jnp.concatenate([wmu_p, wlv_p], axis=1)
    b_cat = jnp.concatenate([bmu_p, blv_p], axis=1)

    # TODO(synk): optionally generate epsilon in-kernel (pltpu.prng_seed +
    # stateful_normal) to drop this HBM stream when jax.random bit-exactness
    # is not required.
    eps = jax.random.normal(key, (B, out_dim), dtype=jnp.float32)
    eps_p = jnp.pad(eps, ((0, b_pad - B), (0, out_pad - out_dim)))

    kern = functools.partial(_vib_train_kernel, out_pad=out_pad, batch=B,
                             block_b=tb, negative_slope=negative_slope)
    z, klp = pl.pallas_call(
        kern,
        out_shape=(jax.ShapeDtypeStruct((b_pad, out_pad), x.dtype),
                   jax.ShapeDtypeStruct((n_tiles, 128), jnp.float32)),
        grid=(n_tiles,),
        in_specs=[pl.BlockSpec((tb, in_dim), lambda i: (i, 0)),
                  pl.BlockSpec((in_dim, 2 * out_pad), lambda i: (0, 0)),   # resident
                  pl.BlockSpec((1, 2 * out_pad), lambda i: (0, 0)),        # resident
                  pl.BlockSpec((tb, out_pad), lambda i: (i, 0))],
        out_specs=(pl.BlockSpec((tb, out_pad), lambda i: (i, 0)),
                   pl.BlockSpec((1, 128), lambda i: (i, 0))),
        compiler_params=cparams,
    )(x_p, w_cat, b_cat, eps_p)

    kl = -0.5 * lambda_ * (jnp.sum(klp[:, 0]) / B)
    return z[:B, :out_dim], kl


def _reference(x, w_mu, b_mu, w_lv, b_lv, eps, lambda_, negative_slope=None):
    if negative_slope is not None:
        x = jnp.where(x > 0, x, x * negative_slope)
    mu = x @ w_mu + b_mu
    log_var = x @ w_lv + b_lv
    kl = -0.5 * lambda_ * jnp.mean(
        jnp.sum(1 + log_var - jnp.square(mu) - jnp.exp(log_var), axis=1))
    z = eps * jnp.exp(log_var / 2) + mu
    return z, kl


if __name__ == "__main__":
    key = jax.random.PRNGKey(0)
    k_x, k_wmu, k_bmu, k_wlv, k_blv, k_eps = jax.random.split(key, 6)

    B, in_dim, out_dim = 8, 32, 16
    x = jax.random.normal(k_x, (B, in_dim), dtype=jnp.float32)

    # Deterministic parameter init (mimics nn.Linear's U(-1/sqrt(in), 1/sqrt(in))).
    bound = 1.0 / (in_dim ** 0.5)
    w_mu = jax.random.uniform(k_wmu, (in_dim, out_dim), jnp.float32, -bound, bound)
    b_mu = jax.random.uniform(k_bmu, (out_dim,), jnp.float32, -bound, bound)
    w_lv = jax.random.uniform(k_wlv, (in_dim, out_dim), jnp.float32, -bound, bound)
    b_lv = jax.random.uniform(k_blv, (out_dim,), jnp.float32, -bound, bound)

    # --- training path, no pre_activation ---
    z, kl = vib_forward(x, w_mu, b_mu, w_lv, b_lv, lambda_=0.05,
                        key=k_eps, training=True, negative_slope=None)
    jax.block_until_ready((z, kl))

    eps = jax.random.normal(k_eps, (B, out_dim), dtype=jnp.float32)
    z_ref, kl_ref = _reference(x, w_mu, b_mu, w_lv, b_lv, eps, 0.05)
    assert jnp.allclose(z, z_ref, atol=1e-5, rtol=1e-5)
    assert jnp.allclose(kl, kl_ref, atol=1e-5, rtol=1e-5)

    # --- training path with LeakyReLU(0.03) pre_activation and ragged batch ---
    B2 = 5
    x2 = x[:B2]
    z2, kl2 = vib_forward(x2, w_mu, b_mu, w_lv, b_lv, lambda_=0.05,
                          key=k_eps, training=True, negative_slope=0.03)
    jax.block_until_ready((z2, kl2))
    eps2 = jax.random.normal(k_eps, (B2, out_dim), dtype=jnp.float32)
    z2_ref, kl2_ref = _reference(x2, w_mu, b_mu, w_lv, b_lv, eps2, 0.05,
                                 negative_slope=0.03)
    assert jnp.allclose(z2, z2_ref, atol=1e-5, rtol=1e-5)
    assert jnp.allclose(kl2, kl2_ref, atol=1e-5, rtol=1e-5)

    # --- eval path (returns mu only) ---
    mu = vib_forward(x, w_mu, b_mu, w_lv, b_lv, training=False)
    jax.block_until_ready(mu)
    assert jnp.allclose(mu, x @ w_mu + b_mu, atol=1e-5, rtol=1e-5)

    print("KERNEL_OK")
</pallas_src>

<mosaic_0001>
module attributes {stable_mosaic.version = 11 : i64} {
  func.func @_vib_train_kernel(%arg0: i32, %arg1: memref<8x32xf32, #tpu.memory_space<vmem>>, %arg2: memref<32x256xf32, #tpu.memory_space<vmem>>, %arg3: memref<1x256xf32, #tpu.memory_space<vmem>>, %arg4: memref<8x128xf32, #tpu.memory_space<vmem>>, %arg5: memref<8x128xf32, #tpu.memory_space<vmem>>, %arg6: memref<1x128xf32, #tpu.memory_space<vmem>>) attributes {dimension_semantics = [#tpu.dimension_semantics<parallel>], iteration_bounds = array<i64: 1>, scalar_prefetch = 0 : i64, scratch_operands = 0 : i64, tpu.core_type = #tpu.core_type<tc>, window_params = [{transform_indices = @transform_0, window_bounds = array<i64: 8, 32>}, {pipeline_mode = #tpu.pipeline_mode<synchronous>, transform_indices = @transform_1, window_bounds = array<i64: 32, 256>}, {pipeline_mode = #tpu.pipeline_mode<synchronous>, transform_indices = @transform_2, window_bounds = array<i64: 1, 256>}, {transform_indices = @transform_3, window_bounds = array<i64: 8, 128>}, {transform_indices = @transform_4, window_bounds = array<i64: 8, 128>}, {transform_indices = @transform_5, window_bounds = array<i64: 1, 128>}]} {
    %c0 = arith.constant 0 : index
    %c0_0 = arith.constant 0 : index
    %0 = vector.load %arg1[%c0, %c0_0] : memref<8x32xf32, #tpu.memory_space<vmem>>, vector<8x32xf32>
    %c0_1 = arith.constant 0 : index
    %c0_2 = arith.constant 0 : index
    %1 = vector.load %arg2[%c0_1, %c0_2] : memref<32x256xf32, #tpu.memory_space<vmem>>, vector<32x256xf32>
    %cst = arith.constant dense<0.000000e+00> : vector<8x256xf32>
    %2 = tpu.matmul %0, %1, %cst {dimension_numbers = #tpu.dot_dimension_numbers<[1], [0], [0], [1], [0, 0, 1, 1], [], []>} : vector<8x32xf32>, vector<32x256xf32>, vector<8x256xf32> -> vector<8x256xf32>
    %c0_3 = arith.constant 0 : index
    %c0_4 = arith.constant 0 : index
    %3 = vector.load %arg3[%c0_3, %c0_4] : memref<1x256xf32, #tpu.memory_space<vmem>>, vector<1x256xf32>
    %4 = vector.broadcast %3 : vector<1x256xf32> to vector<8x256xf32>
    %5 = arith.addf %2, %4 : vector<8x256xf32>
    %6 = vector.extract_strided_slice %5 {offsets = [0, 0], sizes = [8, 128], strides = [1, 1]} : vector<8x256xf32> to vector<8x128xf32>
    %7 = vector.extract_strided_slice %5 {offsets = [0, 128], sizes = [8, 128], strides = [1, 1]} : vector<8x256xf32> to vector<8x128xf32>
    %cst_5 = arith.constant 5.000000e-01 : f32
    %8 = vector.broadcast %cst_5 : f32 to vector<8x128xf32>
    %9 = arith.mulf %8, %7 : vector<8x128xf32>
    %10 = math.exp %9 : vector<8x128xf32>
    %cst_6 = arith.constant 1.000000e+00 : f32
    %11 = vector.broadcast %cst_6 : f32 to vector<8x128xf32>
    %12 = arith.addf %11, %7 : vector<8x128xf32>
    %13 = arith.mulf %6, %6 : vector<8x128xf32>
    %14 = arith.subf %12, %13 : vector<8x128xf32>
    %15 = arith.mulf %10, %10 : vector<8x128xf32>
    %16 = arith.subf %14, %15 : vector<8x128xf32>
    %cst_7 = arith.constant dense<0.000000e+00> : vector<8xf32>
    %17 = vector.multi_reduction <add>, %16, %cst_7 [1] : vector<8x128xf32> to vector<8xf32>
    %18 = vector.shape_cast %17 : vector<8xf32> to vector<8x1xf32>
    %c8_i32 = arith.constant 8 : i32
    %19 = arith.muli %arg0, %c8_i32 : i32
    %20 = tpu.iota {dimensions = array<i32: 0>} : vector<8x1xi32>
    %21 = vector.broadcast %19 : i32 to vector<8x1xi32>
    %22 = arith.addi %21, %20 : vector<8x1xi32>
    %c8_i32_8 = arith.constant 8 : i32
    %23 = vector.broadcast %c8_i32_8 : i32 to vector<8x1xi32>
    %24 = arith.cmpi slt, %22, %23 : vector<8x1xi32>
    %cst_9 = arith.constant 0.000000e+00 : f32
    %25 = vector.broadcast %cst_9 : f32 to vector<8x1xf32>
    %26 = arith.select %24, %18, %25 : vector<8x1xi1>, vector<8x1xf32>
    %27 = vector.shape_cast %26 : vector<8x1xf32> to vector<1x8x1xf32>
    %cst_10 = arith.constant dense<0.000000e+00> : vector<1xf32>
    %28 = vector.multi_reduction <add>, %27, %cst_10 [1, 2] : vector<1x8x1xf32> to vector<1xf32>
    %29 = vector.shape_cast %28 : vector<1xf32> to vector<1x1x1xf32>
    %30 = vector.extract %29[0, 0, 0] : f32 from vector<1x1x1xf32>
    %31 = vector.broadcast %30 : f32 to vector<1x128xf32>
    %c0_11 = arith.constant 0 : index
    %c0_12 = arith.constant 0 : index
    %32 = vector.load %arg6[%c0_11, %c0_12] : memref<1x128xf32, #tpu.memory_space<vmem>>, vector<1x128xf32>
    tpu.vector_store %arg6[%c0_11, %c0_12], %31 {strides = array<i32>} : memref<1x128xf32, #tpu.memory_space<vmem>>, vector<1x128xf32>,
    %c0_13 = arith.constant 0 : index
    %c0_14 = arith.constant 0 : index
    %33 = vector.load %arg4[%c0_13, %c0_14] : memref<8x128xf32, #tpu.memory_space<vmem>>, vector<8x128xf32>
    %34 = arith.mulf %33, %10 : vector<8x128xf32>
    %35 = arith.addf %34, %6 : vector<8x128xf32>
    %c0_15 = arith.constant 0 : index
    %c0_16 = arith.constant 0 : index
    %36 = vector.load %arg5[%c0_15, %c0_16] : memref<8x128xf32, #tpu.memory_space<vmem>>, vector<8x128xf32>
    tpu.vector_store %arg5[%c0_15, %c0_16], %35 {strides = array<i32>} : memref<8x128xf32, #tpu.memory_space<vmem>>, vector<8x128xf32>,
    return
  }
  func.func @transform_0(%arg0: i32) -> (i32, i32) {
    %c0_i32 = arith.constant 0 : i32
    %c0_i32_0 = arith.constant 0 : i32
    return %arg0, %c0_i32 : i32, i32
  }
  func.func @transform_1(%arg0: i32) -> (i32, i32) {
    %c0_i32 = arith.constant 0 : i32
    %c0_i32_0 = arith.constant 0 : i32
    %c0_i32_1 = arith.constant 0 : i32
    return %c0_i32, %c0_i32_0 : i32, i32
  }
  func.func @transform_2(%arg0: i32) -> (i32, i32) {
    %c0_i32 = arith.constant 0 : i32
    %c0_i32_0 = arith.constant 0 : i32
    %c0_i32_1 = arith.constant 0 : i32
    return %c0_i32, %c0_i32_0 : i32, i32
  }
  func.func @transform_3(%arg0: i32) -> (i32, i32) {
    %c0_i32 = arith.constant 0 : i32
    %c0_i32_0 = arith.constant 0 : i32
    return %arg0, %c0_i32 : i32, i32
  }
  func.func @transform_4(%arg0: i32) -> (i32, i32) {
    %c0_i32 = arith.constant 0 : i32
    %c0_i32_0 = arith.constant 0 : i32
    return %arg0, %c0_i32 : i32, i32
  }
  func.func @transform_5(%arg0: i32) -> (i32, i32) {
    %c0_i32 = arith.constant 0 : i32
    %c0_i32_0 = arith.constant 0 : i32
    return %arg0, %c0_i32 : i32, i32
  }
}

</mosaic_0001>

<llo_original>
// kernel: tpu_custom_call.1
$region0: #{tpu_custom_call.1}
  #allocation0 [shape = 'u32[]', space=smem, size = 0x4, offset = 0x4, fixed_abs, tag = 'smem constant byte address 0x4 - core index']
  #allocation1 [shape = 'u32[144,128]{1,0:T(1,128)}', space=vmem, size = 0x12000, scoped, tag = 'internal scratch']
  %s0 = inlined_call_operand.hbm [shape: f32[8,32], index: 0, kind: input, shape index: {}]
  %s1 = inlined_call_operand.hbm [shape: f32[32,256], index: 1, kind: input, shape index: {}]
  %s2 = inlined_call_operand.vmem [shape: f32[1,256], index: 2, kind: input, shape index: {}]
  %s3 = inlined_call_operand.hbm [shape: f32[8,128], index: 3, kind: input, shape index: {}]
  %s4 = inlined_call_operand.hbm [shape: f32[8,128], index: 4, kind: output, shape index: {0}]
  %s5 = inlined_call_operand.hbm [shape: f32[1,128], index: 5, kind: output, shape index: {1}]
  %6 = xla_tuple %s4, %s5
  %s7 = sld [smem:[#allocation0]]
  $region46: #{tpu_custom_call.1} parent=0
    _
  %s9 = ssub.s32 1, %s7
  %s10 = scalar_select 0, %s9, %s7
  $region1: #{tpu_custom_call.1} parent=0
    #allocation2 [shape = 'u8[4096]{0}', space=vmem, size = 0x1000, scoped, tag = 'input window, operand 0, single buffered']
    #allocation3 [shape = 's32[1]{0}', space=sflag, size = 0x4, scoped, tag = 'scoped memory for tpu_custom_call.1']
    #allocation4 [shape = 's32[1]{0}', space=sflag, size = 0x4, scoped, tag = 'scoped memory for tpu_custom_call.1']
    #allocation5 [shape = 'u8[32768]{0}', space=vmem, size = 0x8000, scoped, tag = 'input window, operand 1, single buffered']
    #allocation6 [shape = 's32[1]{0}', space=sflag, size = 0x4, scoped, tag = 'scoped memory for tpu_custom_call.1']
    #allocation7 [shape = 'u8[4096]{0}', space=vmem, size = 0x1000, scoped, tag = 'input window, operand 3, single buffered']
    #allocation8 [shape = 'u8[4096]{0}', space=vmem, size = 0x1000, scoped, tag = 'output window, operand 0, single buffered']
    #allocation9 [shape = 'u8[512]{0}', space=vmem, size = 0x400, scoped, tag = 'output window, operand 1, single buffered']
    #allocation10 [shape = 's32[1]{0}', space=sflag, size = 0x4, scoped, tag = 'scoped memory for tpu_custom_call.1']
    %11 = vsyncpa [#allocation3], 0
    %12 = vsyncpa [#allocation6], 0
    %13 = vsyncpa [#allocation4], 0
    %14 = vsyncpa [#allocation10], 0
    // Predicated region
    $region2: #{tpu_custom_call.1} parent=1 // pred_check
      _
    $region3: #{tpu_custom_call.1} parent=1 // pred_check_branch
      %16 = sbr.rel (0) target = $region5
    $region4: #{tpu_custom_call.1} parent=1 // pred_region
      %s18 = ssub.s32 128, 128
      %19 = vsyncadd [#allocation3], %s18
      %s21 = sshll.u32 [#allocation2], 4
      %s22 = int_to_ptr.vmem [resolvable:$true] %s21
      %24 = dma.hbm_to_vmem [thread:$0]  %s0, 128, %s22, [#allocation3]
    $region5: #{tpu_custom_call.1} parent=1 // pred_fallthru
      _
    // Predicated region
    $region6: #{tpu_custom_call.1} parent=1 // pred_check
      _
    $region7: #{tpu_custom_call.1} parent=1 // pred_check_branch
      %26 = sbr.rel (0) target = $region9
    $region8: #{tpu_custom_call.1} parent=1 // pred_region
      %s28 = ssub.s32 1024, 1024
      %29 = vsyncadd [#allocation6], %s28
      %s30 = sshll.u32 [#allocation5], 4
      %s31 = int_to_ptr.vmem [resolvable:$true] %s30
      %36 = dma.hbm_to_vmem [thread:$0]  %s1, 1024, %s31, [#allocation6], 256, 256, 16
    $region9: #{tpu_custom_call.1} parent=1 // pred_fallthru
      _
    // Predicated region
    $region10: #{tpu_custom_call.1} parent=1 // pred_check
      _
    $region11: #{tpu_custom_call.1} parent=1 // pred_check_branch
      %38 = sbr.rel (0) target = $region13
    $region12: #{tpu_custom_call.1} parent=1 // pred_region
      _
    $region13: #{tpu_custom_call.1} parent=1 // pred_fallthru
      _
    // Predicated region
    $region14: #{tpu_custom_call.1} parent=1 // pred_check
      _
    $region15: #{tpu_custom_call.1} parent=1 // pred_check_branch
      %40 = sbr.rel (0) target = $region17
    $region16: #{tpu_custom_call.1} parent=1 // pred_region
      %s42 = ssub.s32 128, 128
      %43 = vsyncadd [#allocation6], %s42
      %s45 = sshll.u32 [#allocation7], 4
      %s46 = int_to_ptr.vmem [resolvable:$true] %s45
      %48 = dma.hbm_to_vmem [thread:$0]  %s3, 128, %s46, [#allocation6]
    $region17: #{tpu_custom_call.1} parent=1 // pred_fallthru
      _
    // Predicated region
    $region18: #{tpu_custom_call.1} parent=1 // pred_check
      _
    $region19: #{tpu_custom_call.1} parent=1 // pred_check_branch
      %50 = sbr.rel (0) target = $region21
    $region20: #{tpu_custom_call.1} parent=1 // pred_region
      %51 = dma.done [#allocation3], 128
    $region21: #{tpu_custom_call.1} parent=1 // pred_fallthru
      _
    // Predicated region
    $region22: #{tpu_custom_call.1} parent=1 // pred_check
      _
    $region23: #{tpu_custom_call.1} parent=1 // pred_check_branch
      %53 = sbr.rel (0) target = $region25
    $region24: #{tpu_custom_call.1} parent=1 // pred_region
      %54 = dma.done [#allocation6], 1024
    $region25: #{tpu_custom_call.1} parent=1 // pred_fallthru
      _
    // Predicated region
    $region26: #{tpu_custom_call.1} parent=1 // pred_check
      _
    $region27: #{tpu_custom_call.1} parent=1 // pred_check_branch
      %56 = sbr.rel (0) target = $region29
    $region28: #{tpu_custom_call.1} parent=1 // pred_region
      %57 = dma.done [#allocation6], 128
    $region29: #{tpu_custom_call.1} parent=1 // pred_fallthru
      _
    %v58 = vld [vmem:[#allocation2] sm:$0xff]
    %v59 = vld [vmem:[#allocation5] sm:$0xff]
    %v60 = vld [vmem:[#allocation5 + $0x8] sm:$0xff]
    %v61 = vld [vmem:[#allocation5 + $0x10] sm:$0xff]
    %v62 = vld [vmem:[#allocation5 + $0x18] sm:$0xff]
    %v63 = vld [vmem:[#allocation5 + $0x20] sm:$0xff]
    %v64 = vld [vmem:[#allocation5 + $0x28] sm:$0xff]
    %v65 = vld [vmem:[#allocation5 + $0x30] sm:$0xff]
    %v66 = vld [vmem:[#allocation5 + $0x38] sm:$0xff]
    %v67 = vld [vmem:[%s2] sm:$0x3]
    %v69 = vlaneseq
    %v70 = vshrl.u32 %v69, 7
    %v71 = vsub.s32 0, %v70
    %v72 = vrot.slane %v67, %v71
    %v73 = vlaneseq
    %v74 = vshrl.u32 %v73, 7
    %v75 = vsub.s32 1, %v74
    %v76 = vrot.slane %v67, %v75
    %vm79 = vcmask 261120
    %v81 = vsel %vm79, %v58, 0
    %83 = vmatprep.subr.mxu0 0.0
    %84 = vmatpush1.msra.mxu0 0.0
    %85 = vmatprep.subr.mxu0 0.0
    %86 = vmatpush1.msra.mxu0 0.0
    %87 = vmatprep.subr.mxu0 0.0
    %88 = vmatpush1.msra.mxu0 0.0
    %89 = vmatprep.subr.mxu0 0.0
    %90 = vmatpush1.msra.mxu0 0.0
    %91 = vmatprep.subr.mxu0 0.0
    %92 = vmatpush1.msra.mxu0 0.0
    %93 = vmatprep.subr.mxu0 0.0
    %94 = vmatpush1.msra.mxu0 0.0
    %95 = vmatprep.subr.mxu0 0.0
    %96 = vmatpush1.msra.mxu0 0.0
    %97 = vmatprep.subr.mxu0 0.0
    %98 = vmatpush1.msra.mxu0 0.0
    %99 = vmatprep.subr.mxu0 0.0
    %100 = vmatpush1.msra.mxu0 0.0
    %101 = vmatprep.subr.mxu0 0.0
    %102 = vmatpush1.msra.mxu0 0.0
    %103 = vmatprep.subr.mxu0 0.0
    %104 = vmatpush1.msra.mxu0 0.0
    %105 = vmatprep.subr.mxu0 0.0
    %106 = vmatpush1.msra.mxu0 0.0
    %107 = vmatprep.subr.mxu0 %v66
    %108 = vmatpush1.msra.mxu0 %v65
    %109 = vmatprep.subr.mxu0 %v64
    %110 = vmatpush1.msra.mxu0 %v63
    %111 = vmatprep.subr.mxu0 %v62
    %112 = vmatpush1.msra.mxu0 %v61
    %113 = vmatprep.subr.mxu0 %v60
    %114 = vmatpush1.msra.mxu0 %v59
    %115 = vmatprep.subr.mxu0 0.0
    %116 = vmatpush2.msra.mxu0 0.0
    %117 = vmatprep.subr.mxu0 0.0
    %118 = vmatpush2.msra.mxu0 0.0
    %119 = vmatprep.subr.mxu0 0.0
    %120 = vmatpush2.msra.mxu0 0.0
    %121 = vmatprep.subr.mxu0 0.0
    %122 = vmatpush2.msra.mxu0 0.0
    %123 = vmatprep.subr.mxu0 0.0
    %124 = vmatpush2.msra.mxu0 0.0
    %125 = vmatprep.subr.mxu0 0.0
    %126 = vmatpush2.msra.mxu0 0.0
    %127 = vmatprep.subr.mxu0 0.0
    %128 = vmatpush2.msra.mxu0 0.0
    %129 = vmatprep.subr.mxu0 0.0
    %130 = vmatpush2.msra.mxu0 0.0
    %131 = vmatprep.subr.mxu0 0.0
    %132 = vmatpush2.msra.mxu0 0.0
    %133 = vmatprep.subr.mxu0 0.0
    %134 = vmatpush2.msra.mxu0 0.0
    %135 = vmatprep.subr.mxu0 0.0
    %136 = vmatpush2.msra.mxu0 0.0
    %137 = vmatprep.subr.mxu0 0.0
    %138 = vmatpush2.msra.mxu0 0.0
    %139 = vmatprep.subr.mxu0 0.0
    %140 = vmatpush2.msra.mxu0 0.0
    %141 = vmatprep.subr.mxu0 0.0
    %142 = vmatpush2.msra.mxu0 0.0
    %143 = vmatprep.subr.mxu0 0.0
    %144 = vmatpush2.msra.mxu0 0.0
    %145 = vmatprep.subr.mxu0 0.0
    %146 = vmatpush2.msra.mxu0 0.0
    %147 = vmatprep.mubr.f32.mxu0 0.0
    %148 = vmatmul.mubr.f32.gmra.mxu0 %v81
    %v149 = vpop.f32.mrf.mxu0
    %v150 = vadd.f32 %v72, %v149
    %v151 = vpop.f32.mrf.mxu0
    %v152 = vadd.f32 %v76, %v151
    %153 = vdwg.mxu0
    %v154 = vmul.f32 %v152, 0.5
    %v155 = vmul.f32 %v154, 1.442695
    %v156 = vpow.pop %v155
    %v157 = vadd.f32 %v152, 1.0
    %v158 = vmul.f32 %v150, %v150
    %v159 = vsub.f32 %v157, %v158
    %v160 = vmul.f32 %v156, %v156
    %v161 = vsub.f32 %v159, %v160
    %162 = vadd.xlane.f32.xlu0 %v161
    %v163 = vpop.xlane.xlu0 %162
    %s164 = smul.u32 0, 8
    %v165 = vlaneseq
    %v166 = vshrl.u32 %v165, 7
    %v167 = vstv %s164
    %v168 = vadd.s32 %v167, %v166
    %vm169 = vcmp.lt.s32.totalorder %v168, 8
    %v170 = vsel %vm169, %v163, 0.0
    %vm171 = vcmask 7168
    %v172 = vsel %vm171, %v170, 0.0
    %173 = vadd.xlane.f32.xlu0 %v172
    %v174 = vpop.xlane.xlu0 %173
    %v175 = vrot.slane %v174, 4
    %v176 = vadd.f32 %v174, %v175
    %v177 = vrot.slane %v176, 2
    %v178 = vadd.f32 %v176, %v177
    %v179 = vrot.slane %v178, 1
    %v180 = vadd.f32 %v178, %v179
    %s181 = vtos %v180
    %v182 = vstv %s181
    %183 = vst [vmem:[#allocation9] sm:$0x1] %v182
    %v184 = vld [vmem:[#allocation7] sm:$0xff]
    %v185 = vmul.f32 %v184, %v156
    %v186 = vadd.f32 %v185, %v150
    %187 = vst [vmem:[#allocation8] sm:$0xff] %v186
    // Predicated region
    $region30: #{tpu_custom_call.1} parent=1 // pred_check
      _
    $region31: #{tpu_custom_call.1} parent=1 // pred_check_branch
      %189 = sbr.rel (0) target = $region33
    $region32: #{tpu_custom_call.1} parent=1 // pred_region
      %s191 = ssub.s32 128, 128
      %192 = vsyncadd [#allocation4], %s191
      %s194 = sshll.u32 [#allocation8], 4
      %s195 = int_to_ptr.vmem [resolvable:$true] %s194
      %197 = dma.vmem_to_hbm [thread:$0]  %s195, 128, %s4, [#allocation4]
    $region33: #{tpu_custom_call.1} parent=1 // pred_fallthru
      _
    // Predicated region
    $region34: #{tpu_custom_call.1} parent=1 // pred_check
      _
    $region35: #{tpu_custom_call.1} parent=1 // pred_check_branch
      %199 = sbr.rel (0) target = $region37
    $region36: #{tpu_custom_call.1} parent=1 // pred_region
      %s201 = ssub.s32 16, 16
      %202 = vsyncadd [#allocation10], %s201
      %s204 = sshll.u32 [#allocation9], 4
      %s205 = int_to_ptr.vmem [resolvable:$true] %s204
      %207 = dma.vmem_to_hbm [thread:$0]  %s205, 16, %s5, [#allocation10]
    $region37: #{tpu_custom_call.1} parent=1 // pred_fallthru
      _
    // Predicated region
    $region38: #{tpu_custom_call.1} parent=1 // pred_check
      _
    $region39: #{tpu_custom_call.1} parent=1 // pred_check_branch
      %209 = sbr.rel (0) target = $region41
    $region40: #{tpu_custom_call.1} parent=1 // pred_region
      %210 = dma.done [#allocation4], 128
    $region41: #{tpu_custom_call.1} parent=1 // pred_fallthru
      _
    // Predicated region
    $region42: #{tpu_custom_call.1} parent=1 // pred_check
      _
    $region43: #{tpu_custom_call.1} parent=1 // pred_check_branch
      %212 = sbr.rel (0) target = $region45
    $region44: #{tpu_custom_call.1} parent=1 // pred_region
      %213 = dma.done [#allocation10], 16
    $region45: #{tpu_custom_call.1} parent=1 // pred_fallthru
      _
    %214 = vsyncpa [#allocation3], 1
    %215 = vsyncpa [#allocation6], 1
    %216 = vsyncpa [#allocation4], 1
    %217 = vsyncpa [#allocation10], 1

</llo_original>
